<compile_context>
chip_gen: v6e
topology: v6e:2x2x1
jax: 0.10.0
libtpu: 0.0.40
codegen_flags: <defaults>
</compile_context>

<pallas_src>
import functools
import math

import jax
import jax.numpy as jnp
from jax import lax
from jax.experimental import pallas as pl
from jax.experimental.pallas import tpu as pltpu


# ---------------------------------------------------------------------------
# Tiling helpers
# ---------------------------------------------------------------------------
def _sublane_unit(dtype):
    return {4: 8, 2: 16, 1: 32}.get(jnp.dtype(dtype).itemsize, 8)


def _pick_tile(dim, desired, unit):
    """Largest tile <= desired that divides dim and is a multiple of `unit`;
    falls back to the full dimension (always a legal block size)."""
    t = min(desired, dim)
    t = (t // unit) * unit
    while t >= unit:
        if dim % t == 0:
            return t
        t -= unit
    return dim


def _heads_per_group(n_head, head_dim):
    """Smallest divisor of n_head whose group width is lane-aligned (%128==0);
    otherwise all heads together (full last dim => always a legal block)."""
    for hpg in range(1, n_head + 1):
        if n_head % hpg == 0 and (hpg * head_dim) % 128 == 0:
            return hpg
    return n_head


# ---------------------------------------------------------------------------
# K-tiled linear: out = x @ W + b.   Grid = (M//tm, N//tn, K//tk).
# ---------------------------------------------------------------------------
def _linear_kernel(x_ref, w_ref, b_ref, o_ref, acc_ref):
    kk = pl.program_id(2)

    @pl.when(kk == 0)
    def _init():
        acc_ref[...] = jnp.zeros_like(acc_ref)

    acc_ref[...] += jnp.dot(x_ref[...], w_ref[...],
                            preferred_element_type=jnp.float32)

    @pl.when(kk == pl.num_programs(2) - 1)
    def _finalize():
        o_ref[...] = (acc_ref[...] + b_ref[...]).astype(o_ref.dtype)


@functools.partial(jax.jit, static_argnames=("tm", "tn", "tk"))
def linear_pallas(x2, w, b, *, tm=512, tn=512, tk=512):
    M, K = x2.shape
    K2, N = w.shape
    assert K == K2
    tm = _pick_tile(M, tm, _sublane_unit(x2.dtype))
    tn = _pick_tile(N, tn, 128)
    tk = _pick_tile(K, tk, 128)
    b2 = b.reshape(1, N)
    return pl.pallas_call(
        _linear_kernel,
        out_shape=jax.ShapeDtypeStruct((M, N), x2.dtype),
        grid_spec=pltpu.PrefetchScalarGridSpec(
            num_scalar_prefetch=0,
            grid=(M // tm, N // tn, K // tk),
            in_specs=[
                pl.BlockSpec((tm, tk), lambda i, j, kk: (i, kk)),  # activations
                pl.BlockSpec((tk, tn), lambda i, j, kk: (kk, j)),  # weights
                pl.BlockSpec((1, tn), lambda i, j, kk: (0, j)),    # bias
            ],
            out_specs=pl.BlockSpec((tm, tn), lambda i, j, kk: (i, j)),
            scratch_shapes=[pltpu.VMEM((tm, tn), jnp.float32)],
        ),
        compiler_params=pltpu.CompilerParams(
            dimension_semantics=("parallel", "parallel", "arbitrary"),
            vmem_limit_bytes=48 * 1024 * 1024,
        ),
    )(x2, w, b2)


# ---------------------------------------------------------------------------
# Fused QKV projection: q/k/v = x @ Wq/Wk/Wv + bq/bk/bv (3 outputs, shared x block).
# ---------------------------------------------------------------------------
def _qkv_kernel(x_ref, wq_ref, wk_ref, wv_ref, bq_ref, bk_ref, bv_ref,
                q_out, k_out, v_out, accq, acck, accv):
    kk = pl.program_id(2)

    @pl.when(kk == 0)
    def _init():
        accq[...] = jnp.zeros_like(accq)
        acck[...] = jnp.zeros_like(acck)
        accv[...] = jnp.zeros_like(accv)

    x = x_ref[...]
    accq[...] += jnp.dot(x, wq_ref[...], preferred_element_type=jnp.float32)
    acck[...] += jnp.dot(x, wk_ref[...], preferred_element_type=jnp.float32)
    accv[...] += jnp.dot(x, wv_ref[...], preferred_element_type=jnp.float32)

    @pl.when(kk == pl.num_programs(2) - 1)
    def _finalize():
        q_out[...] = (accq[...] + bq_ref[...]).astype(q_out.dtype)
        k_out[...] = (acck[...] + bk_ref[...]).astype(k_out.dtype)
        v_out[...] = (accv[...] + bv_ref[...]).astype(v_out.dtype)


@functools.partial(jax.jit, static_argnames=("tm", "tn", "tk"))
def qkv_proj_pallas(x2, wq, wk, wv, bq, bk, bv, *, tm=512, tn=512, tk=512):
    M, K = x2.shape
    N = wq.shape[1]
    tm = _pick_tile(M, tm, _sublane_unit(x2.dtype))
    tn = _pick_tile(N, tn, 128)
    tk = _pick_tile(K, tk, 128)
    bq2, bk2, bv2 = bq.reshape(1, N), bk.reshape(1, N), bv.reshape(1, N)

    x_spec = pl.BlockSpec((tm, tk), lambda i, j, kk: (i, kk))
    w_spec = pl.BlockSpec((tk, tn), lambda i, j, kk: (kk, j))
    b_spec = pl.BlockSpec((1, tn), lambda i, j, kk: (0, j))
    o_spec = pl.BlockSpec((tm, tn), lambda i, j, kk: (i, j))
    out_sds = jax.ShapeDtypeStruct((M, N), x2.dtype)

    return pl.pallas_call(
        _qkv_kernel,
        out_shape=(out_sds, out_sds, out_sds),
        grid_spec=pltpu.PrefetchScalarGridSpec(
            num_scalar_prefetch=0,
            grid=(M // tm, N // tn, K // tk),
            in_specs=[x_spec, w_spec, w_spec, w_spec, b_spec, b_spec, b_spec],
            out_specs=[o_spec, o_spec, o_spec],
            scratch_shapes=[pltpu.VMEM((tm, tn), jnp.float32)] * 3,
        ),
        compiler_params=pltpu.CompilerParams(
            dimension_semantics=("parallel", "parallel", "arbitrary"),
            vmem_limit_bytes=48 * 1024 * 1024,
        ),
    )(x2, wq, wk, wv, bq2, bk2, bv2)


# ---------------------------------------------------------------------------
# Grouped flash-style causal attention directly on (B, S, n_head*D) layout.
# Grid = (B, head_groups, q_tiles, kv_tiles); kv axis is the "arbitrary" reduction.
# ---------------------------------------------------------------------------
def _attn_kernel(q_ref, k_ref, v_ref, o_ref, m_sc, l_sc, acc_sc,
                 *, tq, tk, heads, head_dim, scale):
    qi = pl.program_id(2)
    ki = pl.program_id(3)

    @pl.when(ki == 0)
    def _init():
        m_sc[...] = jnp.full_like(m_sc, -jnp.inf)
        l_sc[...] = jnp.zeros_like(l_sc)
        acc_sc[...] = jnp.zeros_like(acc_sc)

    first_q = qi * tq
    first_k = ki * tk
    visible = first_k <= first_q + (tq - 1)          # block has any unmasked key
    fully_visible = first_k + (tk - 1) <= first_q    # block entirely below diagonal

    def step(masked):
        q = q_ref[0]                                  # (tq, heads*D)
        k = k_ref[0]                                  # (tk, heads*D)
        v = v_ref[0]                                  # (tk, heads*D)
        if masked:
            q_pos = first_q + lax.broadcasted_iota(jnp.int32, (tq, 1), 0)
            k_pos = first_k + lax.broadcasted_iota(jnp.int32, (1, tk), 1)
            mask = q_pos >= k_pos                     # (tq, tk) via broadcast
        for h in range(heads):
            sl = slice(h * head_dim, (h + 1) * head_dim)
            qh = q[:, sl] * scale                     # fold 1/sqrt(D) into q
            kh = k[:, sl]
            vh = v[:, sl]
            # q . k^T contracting D directly (no transposed K tile).
            s = lax.dot_general(qh, kh, (((1,), (1,)), ((), ())),
                                preferred_element_type=jnp.float32)
            if masked:
                s = jnp.where(mask, s, -jnp.inf)
            m_prev = m_sc[h]                                           # (tq, 1)
            m_new = jnp.maximum(m_prev, s.max(axis=-1, keepdims=True))
            alpha = jnp.exp(m_prev - m_new)
            p = jnp.exp(s - m_new)                                     # (tq, tk)
            l_sc[h] = alpha * l_sc[h] + p.sum(axis=-1, keepdims=True)
            acc_sc[h] = alpha * acc_sc[h] + jnp.dot(
                p.astype(vh.dtype), vh, preferred_element_type=jnp.float32)
            m_sc[h] = m_new

    @pl.when(fully_visible)
    def _unmasked():
        step(masked=False)

    @pl.when(jnp.logical_and(visible, jnp.logical_not(fully_visible)))
    def _masked():
        step(masked=True)

    @pl.when(ki == pl.num_programs(3) - 1)
    def _finalize():
        outs = []
        for h in range(heads):
            l = l_sc[h]
            inv = pl.reciprocal(l, approx=True)       # EUP
            inv = inv * (2.0 - l * inv)               # 1 Newton step -> ~f32 accurate
            outs.append((acc_sc[h] * inv).astype(o_ref.dtype))
        o_ref[0] = jnp.concatenate(outs, axis=-1)     # (tq, heads*D) lane-dense store


@functools.partial(jax.jit, static_argnames=("n_head", "tq", "tk"))
def causal_attention_pallas(q, k, v, *, n_head, tq=512, tk=256):
    B, S, HD = q.shape
    D = HD // n_head
    unit = _sublane_unit(q.dtype)
    tq = _pick_tile(S, tq, unit)
    tk = _pick_tile(S, tk, unit)
    hpg = _heads_per_group(n_head, D)                 # heads processed per block
    G = hpg * D                                       # lane width of each block
    n_groups = n_head // hpg
    scale = 1.0 / math.sqrt(D)

    kernel = functools.partial(_attn_kernel, tq=tq, tk=tk,
                               heads=hpg, head_dim=D, scale=scale)

    def q_map(b, g, qi, ki):
        return (b, qi, g)

    def kv_map(b, g, qi, ki):
        # Clamp to the last kv block needed for this q block: repeated block
        # indices suppress the DMA for fully-masked kv blocks (~2x K/V traffic).
        return (b, jnp.minimum(ki, (qi * tq + tq - 1) // tk), g)

    return pl.pallas_call(
        kernel,
        out_shape=jax.ShapeDtypeStruct((B, S, HD), q.dtype),
        grid_spec=pltpu.PrefetchScalarGridSpec(
            num_scalar_prefetch=0,
            grid=(B, n_groups, S // tq, S // tk),
            in_specs=[
                pl.BlockSpec((1, tq, G), q_map),
                pl.BlockSpec((1, tk, G), kv_map),
                pl.BlockSpec((1, tk, G), kv_map),
            ],
            out_specs=pl.BlockSpec((1, tq, G), q_map),
            scratch_shapes=[
                pltpu.VMEM((hpg, tq, 1), jnp.float32),   # running max
                pltpu.VMEM((hpg, tq, 1), jnp.float32),   # running denom
                pltpu.VMEM((hpg, tq, D), jnp.float32),   # output accumulator
            ],
        ),
        compiler_params=pltpu.CompilerParams(
            dimension_semantics=("parallel", "parallel", "parallel", "arbitrary"),
        ),
    )(q, k, v)


# ---------------------------------------------------------------------------
# Full MultiHeadAttention forward (no head transposes anywhere).
# ---------------------------------------------------------------------------
@functools.partial(jax.jit, static_argnames=("n_head",))
def multi_head_attention_pallas(x, wq, bq, wk, bk, wv, bv, wo, bo, *, n_head):
    B, S, H = x.shape
    HD = wq.shape[1]                  # n_head * head_size
    assert HD % n_head == 0
    M = B * S
    x2 = x.reshape(M, H)

    # Fused QKV projection with separate q/k/v outputs (no concat, no slices).
    q2, k2, v2 = qkv_proj_pallas(x2, wq, wk, wv, bq, bk, bv)       # each (M, HD)

    # Reshape only (no data movement); heads stay packed along the feature dim.
    q = q2.reshape(B, S, HD)
    k = k2.reshape(B, S, HD)
    v = v2.reshape(B, S, HD)

    attn = causal_attention_pallas(q, k, v, n_head=n_head)         # (B, S, HD)

    out = linear_pallas(attn.reshape(M, HD), wo, bo)               # (M, H)
    # Output dropout: inference-mode identity.
    return out.reshape(B, S, H)


# ---------------------------------------------------------------------------
# Reference (pure JAX) and deterministic torch-style init.
# ---------------------------------------------------------------------------
def mha_reference(x, wq, bq, wk, bk, wv, bv, wo, bo, n_head):
    B, S, H = x.shape
    HD = wq.shape[1]
    D = HD // n_head

    def proj(w, b):
        return (x.reshape(B * S, H) @ w + b).reshape(B, S, n_head, D).transpose(0, 2, 1, 3)

    q, k, v = proj(wq, bq), proj(wk, bk), proj(wv, bv)
    scores = jnp.einsum("bhqd,bhkd->bhqk", q, k)
    mask = jnp.tril(jnp.ones((S, S), dtype=bool))
    scores = jnp.where(mask[None, None], scores, -jnp.inf)
    w = jax.nn.softmax(scores / math.sqrt(D), axis=-1)
    o = jnp.einsum("bhqk,bhkd->bhqd", w, v)
    o = o.transpose(0, 2, 1, 3).reshape(B, S, HD)
    return (o.reshape(B * S, HD) @ wo + bo).reshape(B, S, H)


def _torch_linear_init(key, fan_in, fan_out):
    """nn.Linear-style U(-1/sqrt(fan_in), 1/sqrt(fan_in)); stored as (in, out)."""
    kw, kb = jax.random.split(key)
    bound = 1.0 / math.sqrt(fan_in)
    w = jax.random.uniform(kw, (fan_in, fan_out), jnp.float32, -bound, bound)
    b = jax.random.uniform(kb, (fan_out,), jnp.float32, -bound, bound)
    return w, b


if __name__ == "__main__":
    # Small config: batch=2, seq=8, hidden=32, n_head=4, head_size=8, dropout=0.0
    B, S, H = 2, 8, 32
    n_head = 4
    D = H // n_head
    HD = n_head * D

    key = jax.random.PRNGKey(0)
    kx, kq, kk, kv, ko = jax.random.split(key, 5)

    x = jax.random.normal(kx, (B, S, H), jnp.float32)
    wq, bq = _torch_linear_init(kq, H, HD)
    wk, bk = _torch_linear_init(kk, H, HD)
    wv, bv = _torch_linear_init(kv, H, HD)
    wo, bo = _torch_linear_init(ko, HD, H)

    out = multi_head_attention_pallas(x, wq, bq, wk, bk, wv, bv, wo, bo, n_head=n_head)
    out = jax.block_until_ready(out)

    ref = mha_reference(x, wq, bq, wk, bk, wv, bv, wo, bo, n_head)
    assert out.shape == (B, S, H)
    assert jnp.allclose(out, ref, atol=2e-4, rtol=2e-4), "mismatch vs JAX reference"

    print("KERNEL_OK")
</pallas_src>

<mosaic_0001>
module attributes {stable_mosaic.version = 11 : i64} {
  func.func @_qkv_kernel(%arg0: i32, %arg1: i32, %arg2: i32, %arg3: memref<16x32xf32, #tpu.memory_space<vmem>>, %arg4: memref<32x32xf32, #tpu.memory_space<vmem>>, %arg5: memref<32x32xf32, #tpu.memory_space<vmem>>, %arg6: memref<32x32xf32, #tpu.memory_space<vmem>>, %arg7: memref<1x32xf32, #tpu.memory_space<vmem>>, %arg8: memref<1x32xf32, #tpu.memory_space<vmem>>, %arg9: memref<1x32xf32, #tpu.memory_space<vmem>>, %arg10: memref<16x32xf32, #tpu.memory_space<vmem>>, %arg11: memref<16x32xf32, #tpu.memory_space<vmem>>, %arg12: memref<16x32xf32, #tpu.memory_space<vmem>>, %arg13: memref<16x32xf32, #tpu.memory_space<vmem>>, %arg14: memref<16x32xf32, #tpu.memory_space<vmem>>, %arg15: memref<16x32xf32, #tpu.memory_space<vmem>>) attributes {dimension_semantics = [#tpu.dimension_semantics<parallel>, #tpu.dimension_semantics<parallel>, #tpu.dimension_semantics<arbitrary>], iteration_bounds = array<i64: 1, 1, 1>, scalar_prefetch = 0 : i64, scratch_operands = 3 : i64, tpu.core_type = #tpu.core_type<tc>, window_params = [{transform_indices = @transform_0, window_bounds = array<i64: 16, 32>}, {transform_indices = @transform_1, window_bounds = array<i64: 32, 32>}, {transform_indices = @transform_2, window_bounds = array<i64: 32, 32>}, {transform_indices = @transform_3, window_bounds = array<i64: 32, 32>}, {transform_indices = @transform_4, window_bounds = array<i64: 1, 32>}, {transform_indices = @transform_5, window_bounds = array<i64: 1, 32>}, {transform_indices = @transform_6, window_bounds = array<i64: 1, 32>}, {transform_indices = @transform_7, window_bounds = array<i64: 16, 32>}, {transform_indices = @transform_8, window_bounds = array<i64: 16, 32>}, {transform_indices = @transform_9, window_bounds = array<i64: 16, 32>}]} {
    %c0_i32 = arith.constant 0 : i32
    %0 = arith.cmpi eq, %arg2, %c0_i32 : i32
    %1 = arith.extui %0 : i1 to i32
    %c0_i32_0 = arith.constant 0 : i32
    %2 = arith.cmpi ne, %1, %c0_i32_0 : i32
    scf.if %2 {
      %cst_24 = arith.constant 0.000000e+00 : f32
      %22 = vector.broadcast %cst_24 : f32 to vector<16x32xf32>
      %c0_25 = arith.constant 0 : index
      %c0_26 = arith.constant 0 : index
      %23 = vector.load %arg13[%c0_25, %c0_26] : memref<16x32xf32, #tpu.memory_space<vmem>>, vector<16x32xf32>
      tpu.vector_store %arg13[%c0_25, %c0_26], %22 {strides = array<i32>} : memref<16x32xf32, #tpu.memory_space<vmem>>, vector<16x32xf32>,
      %cst_27 = arith.constant 0.000000e+00 : f32
      %24 = vector.broadcast %cst_27 : f32 to vector<16x32xf32>
      %c0_28 = arith.constant 0 : index
      %c0_29 = arith.constant 0 : index
      %25 = vector.load %arg14[%c0_28, %c0_29] : memref<16x32xf32, #tpu.memory_space<vmem>>, vector<16x32xf32>
      tpu.vector_store %arg14[%c0_28, %c0_29], %24 {strides = array<i32>} : memref<16x32xf32, #tpu.memory_space<vmem>>, vector<16x32xf32>,
      %cst_30 = arith.constant 0.000000e+00 : f32
      %26 = vector.broadcast %cst_30 : f32 to vector<16x32xf32>
      %c0_31 = arith.constant 0 : index
      %c0_32 = arith.constant 0 : index
      %27 = vector.load %arg15[%c0_31, %c0_32] : memref<16x32xf32, #tpu.memory_space<vmem>>, vector<16x32xf32>
      tpu.vector_store %arg15[%c0_31, %c0_32], %26 {strides = array<i32>} : memref<16x32xf32, #tpu.memory_space<vmem>>, vector<16x32xf32>,
    } else {
    }
    %c0 = arith.constant 0 : index
    %c0_1 = arith.constant 0 : index
    %3 = vector.load %arg3[%c0, %c0_1] : memref<16x32xf32, #tpu.memory_space<vmem>>, vector<16x32xf32>
    %c0_2 = arith.constant 0 : index
    %c0_3 = arith.constant 0 : index
    %4 = vector.load %arg13[%c0_2, %c0_3] : memref<16x32xf32, #tpu.memory_space<vmem>>, vector<16x32xf32>
    %c0_4 = arith.constant 0 : index
    %c0_5 = arith.constant 0 : index
    %5 = vector.load %arg4[%c0_4, %c0_5] : memref<32x32xf32, #tpu.memory_space<vmem>>, vector<32x32xf32>
    %cst = arith.constant dense<0.000000e+00> : vector<16x32xf32>
    %6 = tpu.matmul %3, %5, %cst {dimension_numbers = #tpu.dot_dimension_numbers<[1], [0], [0], [1], [0, 0, 1, 1], [], []>} : vector<16x32xf32>, vector<32x32xf32>, vector<16x32xf32> -> vector<16x32xf32>
    %7 = arith.addf %4, %6 : vector<16x32xf32>
    %c0_6 = arith.constant 0 : index
    %c0_7 = arith.constant 0 : index
    %8 = vector.load %arg13[%c0_6, %c0_7] : memref<16x32xf32, #tpu.memory_space<vmem>>, vector<16x32xf32>
    tpu.vector_store %arg13[%c0_6, %c0_7], %7 {strides = array<i32>} : memref<16x32xf32, #tpu.memory_space<vmem>>, vector<16x32xf32>,
    %c0_8 = arith.constant 0 : index
    %c0_9 = arith.constant 0 : index
    %9 = vector.load %arg14[%c0_8, %c0_9] : memref<16x32xf32, #tpu.memory_space<vmem>>, vector<16x32xf32>
    %c0_10 = arith.constant 0 : index
    %c0_11 = arith.constant 0 : index
    %10 = vector.load %arg5[%c0_10, %c0_11] : memref<32x32xf32, #tpu.memory_space<vmem>>, vector<32x32xf32>
    %cst_12 = arith.constant dense<0.000000e+00> : vector<16x32xf32>
    %11 = tpu.matmul %3, %10, %cst_12 {dimension_numbers = #tpu.dot_dimension_numbers<[1], [0], [0], [1], [0, 0, 1, 1], [], []>} : vector<16x32xf32>, vector<32x32xf32>, vector<16x32xf32> -> vector<16x32xf32>
    %12 = arith.addf %9, %11 : vector<16x32xf32>
    %c0_13 = arith.constant 0 : index
    %c0_14 = arith.constant 0 : index
    %13 = vector.load %arg14[%c0_13, %c0_14] : memref<16x32xf32, #tpu.memory_space<vmem>>, vector<16x32xf32>
    tpu.vector_store %arg14[%c0_13, %c0_14], %12 {strides = array<i32>} : memref<16x32xf32, #tpu.memory_space<vmem>>, vector<16x32xf32>,
    %c0_15 = arith.constant 0 : index
    %c0_16 = arith.constant 0 : index
    %14 = vector.load %arg15[%c0_15, %c0_16] : memref<16x32xf32, #tpu.memory_space<vmem>>, vector<16x32xf32>
    %c0_17 = arith.constant 0 : index
    %c0_18 = arith.constant 0 : index
    %15 = vector.load %arg6[%c0_17, %c0_18] : memref<32x32xf32, #tpu.memory_space<vmem>>, vector<32x32xf32>
    %cst_19 = arith.constant dense<0.000000e+00> : vector<16x32xf32>
    %16 = tpu.matmul %3, %15, %cst_19 {dimension_numbers = #tpu.dot_dimension_numbers<[1], [0], [0], [1], [0, 0, 1, 1], [], []>} : vector<16x32xf32>, vector<32x32xf32>, vector<16x32xf32> -> vector<16x32xf32>
    %17 = arith.addf %14, %16 : vector<16x32xf32>
    %c0_20 = arith.constant 0 : index
    %c0_21 = arith.constant 0 : index
    %18 = vector.load %arg15[%c0_20, %c0_21] : memref<16x32xf32, #tpu.memory_space<vmem>>, vector<16x32xf32>
    tpu.vector_store %arg15[%c0_20, %c0_21], %17 {strides = array<i32>} : memref<16x32xf32, #tpu.memory_space<vmem>>, vector<16x32xf32>,
    %c0_i32_22 = arith.constant 0 : i32
    %19 = arith.cmpi eq, %arg2, %c0_i32_22 : i32
    %20 = arith.extui %19 : i1 to i32
    %c0_i32_23 = arith.constant 0 : i32
    %21 = arith.cmpi ne, %20, %c0_i32_23 : i32
    scf.if %21 {
      %c0_24 = arith.constant 0 : index
      %c0_25 = arith.constant 0 : index
      %22 = vector.load %arg13[%c0_24, %c0_25] : memref<16x32xf32, #tpu.memory_space<vmem>>, vector<16x32xf32>
      %c0_26 = arith.constant 0 : index
      %c0_27 = arith.constant 0 : index
      %23 = vector.load %arg7[%c0_26, %c0_27] : memref<1x32xf32, #tpu.memory_space<vmem>>, vector<1x32xf32>
      %24 = vector.broadcast %23 : vector<1x32xf32> to vector<16x32xf32>
      %25 = arith.addf %22, %24 : vector<16x32xf32>
      %c0_28 = arith.constant 0 : index
      %c0_29 = arith.constant 0 : index
      %26 = vector.load %arg10[%c0_28, %c0_29] : memref<16x32xf32, #tpu.memory_space<vmem>>, vector<16x32xf32>
      tpu.vector_store %arg10[%c0_28, %c0_29], %25 {strides = array<i32>} : memref<16x32xf32, #tpu.memory_space<vmem>>, vector<16x32xf32>,
      %c0_30 = arith.constant 0 : index
      %c0_31 = arith.constant 0 : index
      %27 = vector.load %arg14[%c0_30, %c0_31] : memref<16x32xf32, #tpu.memory_space<vmem>>, vector<16x32xf32>
      %c0_32 = arith.constant 0 : index
      %c0_33 = arith.constant 0 : index
      %28 = vector.load %arg8[%c0_32, %c0_33] : memref<1x32xf32, #tpu.memory_space<vmem>>, vector<1x32xf32>
      %29 = vector.broadcast %28 : vector<1x32xf32> to vector<16x32xf32>
      %30 = arith.addf %27, %29 : vector<16x32xf32>
      %c0_34 = arith.constant 0 : index
      %c0_35 = arith.constant 0 : index
      %31 = vector.load %arg11[%c0_34, %c0_35] : memref<16x32xf32, #tpu.memory_space<vmem>>, vector<16x32xf32>
      tpu.vector_store %arg11[%c0_34, %c0_35], %30 {strides = array<i32>} : memref<16x32xf32, #tpu.memory_space<vmem>>, vector<16x32xf32>,
      %c0_36 = arith.constant 0 : index
      %c0_37 = arith.constant 0 : index
      %32 = vector.load %arg15[%c0_36, %c0_37] : memref<16x32xf32, #tpu.memory_space<vmem>>, vector<16x32xf32>
      %c0_38 = arith.constant 0 : index
      %c0_39 = arith.constant 0 : index
      %33 = vector.load %arg9[%c0_38, %c0_39] : memref<1x32xf32, #tpu.memory_space<vmem>>, vector<1x32xf32>
      %34 = vector.broadcast %33 : vector<1x32xf32> to vector<16x32xf32>
      %35 = arith.addf %32, %34 : vector<16x32xf32>
      %c0_40 = arith.constant 0 : index
      %c0_41 = arith.constant 0 : index
      %36 = vector.load %arg12[%c0_40, %c0_41] : memref<16x32xf32, #tpu.memory_space<vmem>>, vector<16x32xf32>
      tpu.vector_store %arg12[%c0_40, %c0_41], %35 {strides = array<i32>} : memref<16x32xf32, #tpu.memory_space<vmem>>, vector<16x32xf32>,
    } else {
    }
    return
  }
  func.func @transform_0(%arg0: i32, %arg1: i32, %arg2: i32) -> (i32, i32) {
    %c0_i32 = arith.constant 0 : i32
    return %arg0, %arg2 : i32, i32
  }
  func.func @transform_1(%arg0: i32, %arg1: i32, %arg2: i32) -> (i32, i32) {
    %c0_i32 = arith.constant 0 : i32
    return %arg2, %arg1 : i32, i32
  }
  func.func @transform_2(%arg0: i32, %arg1: i32, %arg2: i32) -> (i32, i32) {
    %c0_i32 = arith.constant 0 : i32
    return %arg2, %arg1 : i32, i32
  }
  func.func @transform_3(%arg0: i32, %arg1: i32, %arg2: i32) -> (i32, i32) {
    %c0_i32 = arith.constant 0 : i32
    return %arg2, %arg1 : i32, i32
  }
  func.func @transform_4(%arg0: i32, %arg1: i32, %arg2: i32) -> (i32, i32) {
    %c0_i32 = arith.constant 0 : i32
    %c0_i32_0 = arith.constant 0 : i32
    return %c0_i32, %arg1 : i32, i32
  }
  func.func @transform_5(%arg0: i32, %arg1: i32, %arg2: i32) -> (i32, i32) {
    %c0_i32 = arith.constant 0 : i32
    %c0_i32_0 = arith.constant 0 : i32
    return %c0_i32, %arg1 : i32, i32
  }
  func.func @transform_6(%arg0: i32, %arg1: i32, %arg2: i32) -> (i32, i32) {
    %c0_i32 = arith.constant 0 : i32
    %c0_i32_0 = arith.constant 0 : i32
    return %c0_i32, %arg1 : i32, i32
  }
  func.func @transform_7(%arg0: i32, %arg1: i32, %arg2: i32) -> (i32, i32) {
    %c0_i32 = arith.constant 0 : i32
    return %arg0, %arg1 : i32, i32
  }
  func.func @transform_8(%arg0: i32, %arg1: i32, %arg2: i32) -> (i32, i32) {
    %c0_i32 = arith.constant 0 : i32
    return %arg0, %arg1 : i32, i32
  }
  func.func @transform_9(%arg0: i32, %arg1: i32, %arg2: i32) -> (i32, i32) {
    %c0_i32 = arith.constant 0 : i32
    return %arg0, %arg1 : i32, i32
  }
}

</mosaic_0001>

<llo_original>
// kernel: qkv_proj_pallas.1
$region0: #{qkv_proj_pallas.1}
  #allocation0 [shape = 'u32[]', space=smem, size = 0x4, offset = 0x4, fixed_abs, tag = 'smem constant byte address 0x4 - core index']
  #allocation1 [shape = 'u32[144,128]{1,0:T(1,128)}', space=vmem, size = 0x12000, scoped, tag = 'internal scratch']
  #allocation2 [shape = 'f32[16,32]{1,0:T(8,128)}', space=vmem, size = 0x2000, scoped, tag = 'scratch operand']
  #allocation3 [shape = 'f32[16,32]{1,0:T(8,128)}', space=vmem, size = 0x2000, scoped, tag = 'scratch operand']
  #allocation4 [shape = 'f32[16,32]{1,0:T(8,128)}', space=vmem, size = 0x2000, scoped, tag = 'scratch operand']
  %s0 = inlined_call_operand.hbm [shape: f32[16,32], index: 0, kind: input, shape index: {}]
  %s1 = inlined_call_operand.hbm [shape: f32[32,32], index: 1, kind: input, shape index: {}]
  %s2 = inlined_call_operand.hbm [shape: f32[32,32], index: 2, kind: input, shape index: {}]
  %s3 = inlined_call_operand.hbm [shape: f32[32,32], index: 3, kind: input, shape index: {}]
  %s4 = inlined_call_operand.vmem [shape: f32[1,32], index: 4, kind: input, shape index: {}]
  %s5 = inlined_call_operand.vmem [shape: f32[1,32], index: 5, kind: input, shape index: {}]
  %s6 = inlined_call_operand.vmem [shape: f32[1,32], index: 6, kind: input, shape index: {}]
  %s7 = inlined_call_operand.hbm [shape: f32[16,32], index: 7, kind: output, shape index: {0}]
  %s8 = inlined_call_operand.hbm [shape: f32[16,32], index: 8, kind: output, shape index: {1}]
  %s9 = inlined_call_operand.hbm [shape: f32[16,32], index: 9, kind: output, shape index: {2}]
  %10 = xla_tuple %s7, %s8, %s9
  %s11 = sld [smem:[#allocation0]]
  $region78: #{qkv_proj_pallas.1} parent=0
    _
  %s13 = ssub.s32 1, %s11
  %s14 = scalar_select 0, %s13, %s11
  $region1: #{qkv_proj_pallas.1} parent=0
    #allocation5 [shape = 'u8[8192]{0}', space=vmem, size = 0x2000, scoped, tag = 'input window, operand 0, single buffered']
    #allocation6 [shape = 's32[1]{0}', space=sflag, size = 0x4, scoped, tag = 'scoped memory for qkv_proj_pallas.1']
    #allocation7 [shape = 's32[1]{0}', space=sflag, size = 0x4, scoped, tag = 'scoped memory for qkv_proj_pallas.1']
    #allocation8 [shape = 'u8[16384]{0}', space=vmem, size = 0x4000, scoped, tag = 'input window, operand 1, single buffered']
    #allocation9 [shape = 's32[1]{0}', space=sflag, size = 0x4, scoped, tag = 'scoped memory for qkv_proj_pallas.1']
    #allocation10 [shape = 'u8[16384]{0}', space=vmem, size = 0x4000, scoped, tag = 'input window, operand 2, single buffered']
    #allocation11 [shape = 'u8[16384]{0}', space=vmem, size = 0x4000, scoped, tag = 'input window, operand 3, single buffered']
    #allocation12 [shape = 's32[1]{0}', space=sflag, size = 0x4, scoped, tag = 'scoped memory for qkv_proj_pallas.1']
    #allocation13 [shape = 'u8[8192]{0}', space=vmem, size = 0x2000, scoped, tag = 'output window, operand 0, single buffered']
    #allocation14 [shape = 'u8[8192]{0}', space=vmem, size = 0x2000, scoped, tag = 'output window, operand 1, single buffered']
    #allocation15 [shape = 's32[1]{0}', space=sflag, size = 0x4, scoped, tag = 'scoped memory for qkv_proj_pallas.1']
    #allocation16 [shape = 'u8[8192]{0}', space=vmem, size = 0x2000, scoped, tag = 'output window, operand 2, single buffered']
    %15 = vsyncpa [#allocation6], 0
    %16 = vsyncpa [#allocation9], 0
    %17 = vsyncpa [#allocation12], 0
    %18 = vsyncpa [#allocation7], 0
    %19 = vsyncpa [#allocation15], 0
    // Predicated region
    $region2: #{qkv_proj_pallas.1} parent=1 // pred_check
      _
    $region3: #{qkv_proj_pallas.1} parent=1 // pred_check_branch
      %21 = sbr.rel (0) target = $region5
    $region4: #{qkv_proj_pallas.1} parent=1 // pred_region
      %s23 = ssub.s32 256, 256
      %24 = vsyncadd [#allocation6], %s23
      %s25 = sshll.u32 [#allocation5], 4
      %s26 = int_to_ptr.vmem [resolvable:$true] %s25
      %31 = dma.hbm_to_vmem [thread:$0]  %s0, 256, %s26, [#allocation6], 128, 128, 8
    $region5: #{qkv_proj_pallas.1} parent=1 // pred_fallthru
      _
    // Predicated region
    $region6: #{qkv_proj_pallas.1} parent=1 // pred_check
      _
    $region7: #{qkv_proj_pallas.1} parent=1 // pred_check_branch
      %33 = sbr.rel (0) target = $region9
    $region8: #{qkv_proj_pallas.1} parent=1 // pred_region
      %s35 = ssub.s32 512, 512
      %36 = vsyncadd [#allocation9], %s35
      %s37 = sshll.u32 [#allocation8], 4
      %s38 = int_to_ptr.vmem [resolvable:$true] %s37
      %43 = dma.hbm_to_vmem [thread:$0]  %s1, 512, %s38, [#allocation9], 128, 128, 8
    $region9: #{qkv_proj_pallas.1} parent=1 // pred_fallthru
      _
    // Predicated region
    $region10: #{qkv_proj_pallas.1} parent=1 // pred_check
      _
    $region11: #{qkv_proj_pallas.1} parent=1 // pred_check_branch
      %45 = sbr.rel (0) target = $region13
    $region12: #{qkv_proj_pallas.1} parent=1 // pred_region
      %s47 = ssub.s32 512, 512
      %48 = vsyncadd [#allocation9], %s47
      %s49 = sshll.u32 [#allocation10], 4
      %s50 = int_to_ptr.vmem [resolvable:$true] %s49
      %55 = dma.hbm_to_vmem [thread:$0]  %s2, 512, %s50, [#allocation9], 128, 128, 8
    $region13: #{qkv_proj_pallas.1} parent=1 // pred_fallthru
      _
    // Predicated region
    $region14: #{qkv_proj_pallas.1} parent=1 // pred_check
      _
    $region15: #{qkv_proj_pallas.1} parent=1 // pred_check_branch
      %57 = sbr.rel (0) target = $region17
    $region16: #{qkv_proj_pallas.1} parent=1 // pred_region
      %s59 = ssub.s32 512, 512
      %60 = vsyncadd [#allocation12], %s59
      %s61 = sshll.u32 [#allocation11], 4
      %s62 = int_to_ptr.vmem [resolvable:$true] %s61
      %67 = dma.hbm_to_vmem [thread:$0]  %s3, 512, %s62, [#allocation12], 128, 128, 8
    $region17: #{qkv_proj_pallas.1} parent=1 // pred_fallthru
      _
    // Predicated region
    $region18: #{qkv_proj_pallas.1} parent=1 // pred_check
      _
    $region19: #{qkv_proj_pallas.1} parent=1 // pred_check_branch
      %69 = sbr.rel (0) target = $region21
    $region20: #{qkv_proj_pallas.1} parent=1 // pred_region
      _
    $region21: #{qkv_proj_pallas.1} parent=1 // pred_fallthru
      _
    // Predicated region
    $region22: #{qkv_proj_pallas.1} parent=1 // pred_check
      _
    $region23: #{qkv_proj_pallas.1} parent=1 // pred_check_branch
      %71 = sbr.rel (0) target = $region25
    $region24: #{qkv_proj_pallas.1} parent=1 // pred_region
      _
    $region25: #{qkv_proj_pallas.1} parent=1 // pred_fallthru
      _
    // Predicated region
    $region26: #{qkv_proj_pallas.1} parent=1 // pred_check
      _
    $region27: #{qkv_proj_pallas.1} parent=1 // pred_check_branch
      %73 = sbr.rel (0) target = $region29
    $region28: #{qkv_proj_pallas.1} parent=1 // pred_region
      _
    $region29: #{qkv_proj_pallas.1} parent=1 // pred_fallthru
      _
    // Predicated region
    $region30: #{qkv_proj_pallas.1} parent=1 // pred_check
      _
    $region31: #{qkv_proj_pallas.1} parent=1 // pred_check_branch
      %75 = sbr.rel (0) target = $region33
    $region32: #{qkv_proj_pallas.1} parent=1 // pred_region
      %76 = dma.done [#allocation6], 256
    $region33: #{qkv_proj_pallas.1} parent=1 // pred_fallthru
      _
    // Predicated region
    $region34: #{qkv_proj_pallas.1} parent=1 // pred_check
      _
    $region35: #{qkv_proj_pallas.1} parent=1 // pred_check_branch
      %78 = sbr.rel (0) target = $region37
    $region36: #{qkv_proj_pallas.1} parent=1 // pred_region
      %79 = dma.done [#allocation9], 512
    $region37: #{qkv_proj_pallas.1} parent=1 // pred_fallthru
      _
    // Predicated region
    $region38: #{qkv_proj_pallas.1} parent=1 // pred_check
      _
    $region39: #{qkv_proj_pallas.1} parent=1 // pred_check_branch
      %81 = sbr.rel (0) target = $region41
    $region40: #{qkv_proj_pallas.1} parent=1 // pred_region
      %82 = dma.done [#allocation9], 512
    $region41: #{qkv_proj_pallas.1} parent=1 // pred_fallthru
      _
    // Predicated region
    $region42: #{qkv_proj_pallas.1} parent=1 // pred_check
      _
    $region43: #{qkv_proj_pallas.1} parent=1 // pred_check_branch
      %84 = sbr.rel (0) target = $region45
    $region44: #{qkv_proj_pallas.1} parent=1 // pred_region
      %85 = dma.done [#allocation12], 512
    $region45: #{qkv_proj_pallas.1} parent=1 // pred_fallthru
      _
    %p86 = scmp.eq.s32.totalorder 0, 0
    // Predicated region
    $region46: #{qkv_proj_pallas.1} parent=1 // pred_check
      %p87 = pneg %p86
    $region47: #{qkv_proj_pallas.1} parent=1 // pred_check_branch
      %89 = sbr.rel (%p87) target = $region49
    $region48: #{qkv_proj_pallas.1} parent=1 // pred_region
      %vm90 = vcmask 261120
      %91 = vst.msk [vmem:[#allocation2] sm:$0xff] %vm90, 0.0
      %92 = vst.msk [vmem:[#allocation2 + $0x8] sm:$0xff] %vm90, 0.0
      %93 = vst.msk [vmem:[#allocation3] sm:$0xff] %vm90, 0.0
      %94 = vst.msk [vmem:[#allocation3 + $0x8] sm:$0xff] %vm90, 0.0
      %95 = vst.msk [vmem:[#allocation4] sm:$0xff] %vm90, 0.0
      %96 = vst.msk [vmem:[#allocation4 + $0x8] sm:$0xff] %vm90, 0.0
    $region49: #{qkv_proj_pallas.1} parent=1 // pred_fallthru
      _
    %v97 = vld [vmem:[#allocation5] sm:$0xff]
    %v98 = vld [vmem:[#allocation5 + $0x8] sm:$0xff]
    %v99 = vld [vmem:[#allocation2] sm:$0xff]
    %v100 = vld [vmem:[#allocation2 + $0x8] sm:$0xff]
    %v101 = vld [vmem:[#allocation8] sm:$0xff]
    %v102 = vld [vmem:[#allocation8 + $0x8] sm:$0xff]
    %v103 = vld [vmem:[#allocation8 + $0x10] sm:$0xff]
    %v104 = vld [vmem:[#allocation8 + $0x18] sm:$0xff]
    %vm105 = vcmask 261120
    %v107 = vsel %vm105, %v97, 0
    %v110 = vsel %vm105, %v98, 0
    %112 = vmatprep.subr.mxu0 0.0
    %113 = vmatpush1.msra.mxu0 0.0
    %114 = vmatprep.subr.mxu0 0.0
    %115 = vmatpush1.msra.mxu0 0.0
    %116 = vmatprep.subr.mxu0 0.0
    %117 = vmatpush1.msra.mxu0 0.0
    %118 = vmatprep.subr.mxu0 0.0
    %119 = vmatpush1.msra.mxu0 0.0
    %120 = vmatprep.subr.mxu0 0.0
    %121 = vmatpush1.msra.mxu0 0.0
    %122 = vmatprep.subr.mxu0 0.0
    %123 = vmatpush1.msra.mxu0 0.0
    %124 = vmatprep.subr.mxu0 0.0
    %125 = vmatpush1.msra.mxu0 0.0
    %126 = vmatprep.subr.mxu0 0.0
    %127 = vmatpush1.msra.mxu0 0.0
    %128 = vmatprep.subr.mxu0 0.0
    %129 = vmatpush1.msra.mxu0 0.0
    %130 = vmatprep.subr.mxu0 0.0
    %131 = vmatpush1.msra.mxu0 0.0
    %132 = vmatprep.subr.mxu0 0.0
    %133 = vmatpush1.msra.mxu0 0.0
    %134 = vmatprep.subr.mxu0 0.0
    %135 = vmatpush1.msra.mxu0 0.0
    %136 = vmatprep.subr.mxu0 0.0
    %137 = vmatpush1.msra.mxu0 %v104
    %138 = vmatprep.subr.mxu0 0.0
    %139 = vmatpush1.msra.mxu0 %v103
    %140 = vmatprep.subr.mxu0 0.0
    %141 = vmatpush1.msra.mxu0 %v102
    %142 = vmatprep.subr.mxu0 0.0
    %143 = vmatpush1.msra.mxu0 %v101
    %144 = vmatprep.subr.mxu0 0.0
    %145 = vmatpush2.msra.mxu0 0.0
    %146 = vmatprep.subr.mxu0 0.0
    %147 = vmatpush2.msra.mxu0 0.0
    %148 = vmatprep.subr.mxu0 0.0
    %149 = vmatpush2.msra.mxu0 0.0
    %150 = vmatprep.subr.mxu0 0.0
    %151 = vmatpush2.msra.mxu0 0.0
    %152 = vmatprep.subr.mxu0 0.0
    %153 = vmatpush2.msra.mxu0 0.0
    %154 = vmatprep.subr.mxu0 0.0
    %155 = vmatpush2.msra.mxu0 0.0
    %156 = vmatprep.subr.mxu0 0.0
    %157 = vmatpush2.msra.mxu0 0.0
    %158 = vmatprep.subr.mxu0 0.0
    %159 = vmatpush2.msra.mxu0 0.0
    %160 = vmatprep.subr.mxu0 0.0
    %161 = vmatpush2.msra.mxu0 0.0
    %162 = vmatprep.subr.mxu0 0.0
    %163 = vmatpush2.msra.mxu0 0.0
    %164 = vmatprep.subr.mxu0 0.0
    %165 = vmatpush2.msra.mxu0 0.0
    %166 = vmatprep.subr.mxu0 0.0
    %167 = vmatpush2.msra.mxu0 0.0
    %168 = vmatprep.subr.mxu0 0.0
    %169 = vmatpush2.msra.mxu0 0.0
    %170 = vmatprep.subr.mxu0 0.0
    %171 = vmatpush2.msra.mxu0 0.0
    %172 = vmatprep.subr.mxu0 0.0
    %173 = vmatpush2.msra.mxu0 0.0
    %174 = vmatprep.subr.mxu0 0.0
    %175 = vmatpush2.msra.mxu0 0.0
    %176 = vmatprep.mubr.f32.mxu0 0.0
    %177 = vmatmul.mubr.f32.gmra.mxu0 %v107
    %v178 = vpop.f32.mrf.mxu0
    %v179 = vadd.f32 0.0, %v178
    %v180 = vpop.f32.mrf.mxu0
    %181 = vmatprep.mubr.f32.mxu0 0.0
    %182 = vmatmul.mubr.f32.gmra.mxu0 %v110
    %v183 = vpop.f32.mrf.mxu0
    %v184 = vadd.f32 0.0, %v183
    %v185 = vpop.f32.mrf.mxu0
    %186 = vdwg.mxu0
    %v187 = vadd.f32 %v99, %v179
    %v188 = vadd.f32 %v100, %v184
    %189 = vst.msk [vmem:[#allocation2] sm:$0xff] %vm105, %v187
    %190 = vst.msk [vmem:[#allocation2 + $0x8] sm:$0xff] %vm105, %v188
    %v191 = vld [vmem:[#allocation3] sm:$0xff]
    %v192 = vld [vmem:[#allocation3 + $0x8] sm:$0xff]
    %v193 = vld [vmem:[#allocation10] sm:$0xff]
    %v194 = vld [vmem:[#allocation10 + $0x8] sm:$0xff]
    %v195 = vld [vmem:[#allocation10 + $0x10] sm:$0xff]
    %v196 = vld [vmem:[#allocation10 + $0x18] sm:$0xff]
    %197 = vmatprep.subr.mxu0 0.0
    %198 = vmatpush1.msra.mxu0 0.0
    %199 = vmatprep.subr.mxu0 0.0
    %200 = vmatpush1.msra.mxu0 0.0
    %201 = vmatprep.subr.mxu0 0.0
    %202 = vmatpush1.msra.mxu0 0.0
    %203 = vmatprep.subr.mxu0 0.0
    %204 = vmatpush1.msra.mxu0 0.0
    %205 = vmatprep.subr.mxu0 0.0
    %206 = vmatpush1.msra.mxu0 0.0
    %207 = vmatprep.subr.mxu0 0.0
    %208 = vmatpush1.msra.mxu0 0.0
    %209 = vmatprep.subr.mxu0 0.0
    %210 = vmatpush1.msra.mxu0 0.0
    %211 = vmatprep.subr.mxu0 0.0
    %212 = vmatpush1.msra.mxu0 0.0
    %213 = vmatprep.subr.mxu0 0.0
    %214 = vmatpush1.msra.mxu0 0.0
    %215 = vmatprep.subr.mxu0 0.0
    %216 = vmatpush1.msra.mxu0 0.0
    %217 = vmatprep.subr.mxu0 0.0
    %218 = vmatpush1.msra.mxu0 0.0
    %219 = vmatprep.subr.mxu0 0.0
    %220 = vmatpush1.msra.mxu0 0.0
    %221 = vmatprep.subr.mxu0 0.0
    %222 = vmatpush1.msra.mxu0 %v196
    %223 = vmatprep.subr.mxu0 0.0
    %224 = vmatpush1.msra.mxu0 %v195
    %225 = vmatprep.subr.mxu0 0.0
    %226 = vmatpush1.msra.mxu0 %v194
    %227 = vmatprep.subr.mxu0 0.0
    %228 = vmatpush1.msra.mxu0 %v193
    %229 = vmatprep.subr.mxu0 0.0
    %230 = vmatpush2.msra.mxu0 0.0
    %231 = vmatprep.subr.mxu0 0.0
    %232 = vmatpush2.msra.mxu0 0.0
    %233 = vmatprep.subr.mxu0 0.0
    %234 = vmatpush2.msra.mxu0 0.0
    %235 = vmatprep.subr.mxu0 0.0
    %236 = vmatpush2.msra.mxu0 0.0
    %237 = vmatprep.subr.mxu0 0.0
    %238 = vmatpush2.msra.mxu0 0.0
    %239 = vmatprep.subr.mxu0 0.0
    %240 = vmatpush2.msra.mxu0 0.0
    %241 = vmatprep.subr.mxu0 0.0
    %242 = vmatpush2.msra.mxu0 0.0
    %243 = vmatprep.subr.mxu0 0.0
    %244 = vmatpush2.msra.mxu0 0.0
    %245 = vmatprep.subr.mxu0 0.0
    %246 = vmatpush2.msra.mxu0 0.0
    %247 = vmatprep.subr.mxu0 0.0
    %248 = vmatpush2.msra.mxu0 0.0
    %249 = vmatprep.subr.mxu0 0.0
    %250 = vmatpush2.msra.mxu0 0.0
    %251 = vmatprep.subr.mxu0 0.0
    %252 = vmatpush2.msra.mxu0 0.0
    %253 = vmatprep.subr.mxu0 0.0
    %254 = vmatpush2.msra.mxu0 0.0
    %255 = vmatprep.subr.mxu0 0.0
    %256 = vmatpush2.msra.mxu0 0.0
    %257 = vmatprep.subr.mxu0 0.0
    %258 = vmatpush2.msra.mxu0 0.0
    %259 = vmatprep.subr.mxu0 0.0
    %260 = vmatpush2.msra.mxu0 0.0
    %261 = vmatprep.mubr.f32.mxu0 0.0
    %262 = vmatmul.mubr.f32.gmra.mxu0 %v107
    %v263 = vpop.f32.mrf.mxu0
    %v264 = vadd.f32 0.0, %v263
    %v265 = vpop.f32.mrf.mxu0
    %266 = vmatprep.mubr.f32.mxu0 0.0
    %267 = vmatmul.mubr.f32.gmra.mxu0 %v110
    %v268 = vpop.f32.mrf.mxu0
    %v269 = vadd.f32 0.0, %v268
    %v270 = vpop.f32.mrf.mxu0
    %271 = vdwg.mxu0
    %v272 = vadd.f32 %v191, %v264
    %v273 = vadd.f32 %v192, %v269
    %274 = vst.msk [vmem:[#allocation3] sm:$0xff] %vm105, %v272
    %275 = vst.msk [vmem:[#allocation3 + $0x8] sm:$0xff] %vm105, %v273
    %v276 = vld [vmem:[#allocation4] sm:$0xff]
    %v277 = vld [vmem:[#allocation4 + $0x8] sm:$0xff]
    %v278 = vld [vmem:[#allocation11] sm:$0xff]
    %v279 = vld [vmem:[#allocation11 + $0x8] sm:$0xff]
    %v280 = vld [vmem:[#allocation11 + $0x10] sm:$0xff]
    %v281 = vld [vmem:[#allocation11 + $0x18] sm:$0xff]
    %282 = vmatprep.subr.mxu0 0.0
    %283 = vmatpush1.msra.mxu0 0.0
    %284 = vmatprep.subr.mxu0 0.0
    %285 = vmatpush1.msra.mxu0 0.0
    %286 = vmatprep.subr.mxu0 0.0
    %287 = vmatpush1.msra.mxu0 0.0
    %288 = vmatprep.subr.mxu0 0.0
    %289 = vmatpush1.msra.mxu0 0.0
    %290 = vmatprep.subr.mxu0 0.0
    %291 = vmatpush1.msra.mxu0 0.0
    %292 = vmatprep.subr.mxu0 0.0
    %293 = vmatpush1.msra.mxu0 0.0
    %294 = vmatprep.subr.mxu0 0.0
    %295 = vmatpush1.msra.mxu0 0.0
    %296 = vmatprep.subr.mxu0 0.0
    %297 = vmatpush1.msra.mxu0 0.0
    %298 = vmatprep.subr.mxu0 0.0
    %299 = vmatpush1.msra.mxu0 0.0
    %300 = vmatprep.subr.mxu0 0.0
    %301 = vmatpush1.msra.mxu0 0.0
    %302 = vmatprep.subr.mxu0 0.0
    %303 = vmatpush1.msra.mxu0 0.0
    %304 = vmatprep.subr.mxu0 0.0
    %305 = vmatpush1.msra.mxu0 0.0
    %306 = vmatprep.subr.mxu0 0.0
    %307 = vmatpush1.msra.mxu0 %v281
    %308 = vmatprep.subr.mxu0 0.0
    %309 = vmatpush1.msra.mxu0 %v280
    %310 = vmatprep.subr.mxu0 0.0
    %311 = vmatpush1.msra.mxu0 %v279
    %312 = vmatprep.subr.mxu0 0.0
    %313 = vmatpush1.msra.mxu0 %v278
    %314 = vmatprep.subr.mxu0 0.0
    %315 = vmatpush2.msra.mxu0 0.0
    %316 = vmatprep.subr.mxu0 0.0
    %317 = vmatpush2.msra.mxu0 0.0
    %318 = vmatprep.subr.mxu0 0.0
    %319 = vmatpush2.msra.mxu0 0.0
    %320 = vmatprep.subr.mxu0 0.0
    %321 = vmatpush2.msra.mxu0 0.0
    %322 = vmatprep.subr.mxu0 0.0
    %323 = vmatpush2.msra.mxu0 0.0
    %324 = vmatprep.subr.mxu0 0.0
    %325 = vmatpush2.msra.mxu0 0.0
    %326 = vmatprep.subr.mxu0 0.0
    %327 = vmatpush2.msra.mxu0 0.0
    %328 = vmatprep.subr.mxu0 0.0
    %329 = vmatpush2.msra.mxu0 0.0
    %330 = vmatprep.subr.mxu0 0.0
    %331 = vmatpush2.msra.mxu0 0.0
    %332 = vmatprep.subr.mxu0 0.0
    %333 = vmatpush2.msra.mxu0 0.0
    %334 = vmatprep.subr.mxu0 0.0
    %335 = vmatpush2.msra.mxu0 0.0
    %336 = vmatprep.subr.mxu0 0.0
    %337 = vmatpush2.msra.mxu0 0.0
    %338 = vmatprep.subr.mxu0 0.0
    %339 = vmatpush2.msra.mxu0 0.0
    %340 = vmatprep.subr.mxu0 0.0
    %341 = vmatpush2.msra.mxu0 0.0
    %342 = vmatprep.subr.mxu0 0.0
    %343 = vmatpush2.msra.mxu0 0.0
    %344 = vmatprep.subr.mxu0 0.0
    %345 = vmatpush2.msra.mxu0 0.0
    %346 = vmatprep.mubr.f32.mxu0 0.0
    %347 = vmatmul.mubr.f32.gmra.mxu0 %v107
    %v348 = vpop.f32.mrf.mxu0
    %v349 = vadd.f32 0.0, %v348
    %v350 = vpop.f32.mrf.mxu0
    %351 = vmatprep.mubr.f32.mxu0 0.0
    %352 = vmatmul.mubr.f32.gmra.mxu0 %v110
    %v353 = vpop.f32.mrf.mxu0
    %v354 = vadd.f32 0.0, %v353
    %v355 = vpop.f32.mrf.mxu0
    %356 = vdwg.mxu0
    %v357 = vadd.f32 %v276, %v349
    %v358 = vadd.f32 %v277, %v354
    %359 = vst.msk [vmem:[#allocation4] sm:$0xff] %vm105, %v357
    %360 = vst.msk [vmem:[#allocation4 + $0x8] sm:$0xff] %vm105, %v358
    // Predicated region
    $region50: #{qkv_proj_pallas.1} parent=1 // pred_check
      %p361 = pneg %p86
    $region51: #{qkv_proj_pallas.1} parent=1 // pred_check_branch
      %363 = sbr.rel (%p361) target = $region53
    $region52: #{qkv_proj_pallas.1} parent=1 // pred_region
      %v364 = vld [vmem:[#allocation2] sm:$0xff]
      %v365 = vld [vmem:[#allocation2 + $0x8] sm:$0xff]
      %v366 = vld [vmem:[%s4] sm:$0x1]
      %v368 = vlaneseq
      %v369 = vshrl.u32 %v368, 7
      %v370 = vsub.s32 0, %v369
      %v371 = vrot.slane %v366, %v370
      %v373 = vadd.f32 %v364, %v371
      %v374 = vadd.f32 %v365, %v371
      %375 = vst.msk [vmem:[#allocation13] sm:$0xff] %vm105, %v373
      %376 = vst.msk [vmem:[#allocation13 + $0x8] sm:$0xff] %vm105, %v374
      %v377 = vld [vmem:[#allocation3] sm:$0xff]
      %v378 = vld [vmem:[#allocation3 + $0x8] sm:$0xff]
      %v379 = vld [vmem:[%s5] sm:$0x1]
      %v381 = vlaneseq
      %v382 = vshrl.u32 %v381, 7
      %v383 = vsub.s32 0, %v382
      %v384 = vrot.slane %v379, %v383
      %v386 = vadd.f32 %v377, %v384
      %v387 = vadd.f32 %v378, %v384
      %388 = vst.msk [vmem:[#allocation14] sm:$0xff] %vm105, %v386
      %389 = vst.msk [vmem:[#allocation14 + $0x8] sm:$0xff] %vm105, %v387
      %v390 = vld [vmem:[#allocation4] sm:$0xff]
      %v391 = vld [vmem:[#allocation4 + $0x8] sm:$0xff]
      %v392 = vld [vmem:[%s6] sm:$0x1]
      %v394 = vlaneseq
      %v395 = vshrl.u32 %v394, 7
      %v396 = vsub.s32 0, %v395
      %v397 = vrot.slane %v392, %v396
      %v399 = vadd.f32 %v390, %v397
      %v400 = vadd.f32 %v391, %v397
      %401 = vst.msk [vmem:[#allocation16] sm:$0xff] %vm105, %v399
      %402 = vst.msk [vmem:[#allocation16 + $0x8] sm:$0xff] %vm105, %v400
    $region53: #{qkv_proj_pallas.1} parent=1 // pred_fallthru
      _
    // Predicated region
    $region54: #{qkv_proj_pallas.1} parent=1 // pred_check
      _
    $region55: #{qkv_proj_pallas.1} parent=1 // pred_check_branch
      %404 = sbr.rel (0) target = $region57
    $region56: #{qkv_proj_pallas.1} parent=1 // pred_region
      %s406 = ssub.s32 256, 256
      %407 = vsyncadd [#allocation7], %s406
      %s408 = sshll.u32 [#allocation13], 4
      %s409 = int_to_ptr.vmem [resolvable:$true] %s408
      %414 = dma.vmem_to_hbm [thread:$0]  %s409, 256, %s7, [#allocation7], 128, 128, 8
    $region57: #{qkv_proj_pallas.1} parent=1 // pred_fallthru
      _
    // Predicated region
    $region58: #{qkv_proj_pallas.1} parent=1 // pred_check
      _
    $region59: #{qkv_proj_pallas.1} parent=1 // pred_check_branch
      %416 = sbr.rel (0) target = $region61
    $region60: #{qkv_proj_pallas.1} parent=1 // pred_region
      %s418 = ssub.s32 256, 256
      %419 = vsyncadd [#allocation15], %s418
      %s420 = sshll.u32 [#allocation14], 4
      %s421 = int_to_ptr.vmem [resolvable:$true] %s420
      %426 = dma.vmem_to_hbm [thread:$0]  %s421, 256, %s8, [#allocation15], 128, 128, 8
    $region61: #{qkv_proj_pallas.1} parent=1 // pred_fallthru
      _
    // Predicated region
    $region62: #{qkv_proj_pallas.1} parent=1 // pred_check
      _
    $region63: #{qkv_proj_pallas.1} parent=1 // pred_check_branch
      %428 = sbr.rel (0) target = $region65
    $region64: #{qkv_proj_pallas.1} parent=1 // pred_region
      %s430 = ssub.s32 256, 256
      %431 = vsyncadd [#allocation15], %s430
      %s432 = sshll.u32 [#allocation16], 4
      %s433 = int_to_ptr.vmem [resolvable:$true] %s432
      %438 = dma.vmem_to_hbm [thread:$0]  %s433, 256, %s9, [#allocation15], 128, 128, 8
    $region65: #{qkv_proj_pallas.1} parent=1 // pred_fallthru
      _
    // Predicated region
    $region66: #{qkv_proj_pallas.1} parent=1 // pred_check
      _
    $region67: #{qkv_proj_pallas.1} parent=1 // pred_check_branch
      %440 = sbr.rel (0) target = $region69
    $region68: #{qkv_proj_pallas.1} parent=1 // pred_region
      %441 = dma.done [#allocation7], 256
    $region69: #{qkv_proj_pallas.1} parent=1 // pred_fallthru
      _
    // Predicated region
    $region70: #{qkv_proj_pallas.1} parent=1 // pred_check
      _
    $region71: #{qkv_proj_pallas.1} parent=1 // pred_check_branch
      %443 = sbr.rel (0) target = $region73
    $region72: #{qkv_proj_pallas.1} parent=1 // pred_region
      %444 = dma.done [#allocation15], 256
    $region73: #{qkv_proj_pallas.1} parent=1 // pred_fallthru
      _
    // Predicated region
    $region74: #{qkv_proj_pallas.1} parent=1 // pred_check
      _
    $region75: #{qkv_proj_pallas.1} parent=1 // pred_check_branch
      %446 = sbr.rel (0) target = $region77
    $region76: #{qkv_proj_pallas.1} parent=1 // pred_region
      %447 = dma.done [#allocation15], 256
    $region77: #{qkv_proj_pallas.1} parent=1 // pred_fallthru
      _
    %448 = vsyncpa [#allocation6], 1
    %449 = vsyncpa [#allocation9], 1
    %450 = vsyncpa [#allocation12], 1
    %451 = vsyncpa [#allocation7], 1
    %452 = vsyncpa [#allocation15], 1

</llo_original>
